<compile_context>
chip_gen: v7x
topology: tpu7x:2x2x1
jax: 0.10.0
libtpu: 0.0.40
codegen_flags: <defaults>
</compile_context>

<pallas_src>
import jax
import jax.numpy as jnp
from jax.experimental import pallas as pl
from jax.experimental.pallas import tpu as pltpu


def _normalize_kernel(img_ref, scale_ref, bias_ref, out_ref):
    # img_ref:   (TR, COLS)  image tile (img.dtype)
    # scale_ref: (TR, 1)     = 1/std     per row (broadcast over lanes)
    # bias_ref:  (TR, 1)     = -mean/std per row (broadcast over lanes)
    # out = img * scale + bias  ==  (img - mean) / std
    scale = scale_ref[...]
    bias = bias_ref[...]
    x = img_ref[...].astype(scale.dtype)   # no-op when compute dtype == img dtype
    out_ref[...] = (x * scale + bias).astype(out_ref.dtype)


def _tpu_generation():
    """Best-effort TPU generation detection (7/6/5, 0 = unknown)."""
    try:
        kind = jax.devices()[0].device_kind.lower()
    except Exception:
        return 0
    if "v7" in kind or "7x" in kind:
        return 7
    if "v6" in kind:
        return 6
    if "v5" in kind:
        return 5
    return 0


def _divisors(x):
    ds = []
    i = 1
    while i * i <= x:
        if x % i == 0:
            ds.append(i)
            if i != x // i:
                ds.append(x // i)
        i += 1
    return sorted(ds)


def _choose_layout(nc, hw, itemsize, sub_unit, target_bytes):
    """Pick r (divides hw) so the 2D view is (nc*r, hw//r).

    Preference order (highest first):
      1. a minimal full-width block (sub_unit rows) fits the tile budget
      2. cols is lane-dense: >= 128 and a multiple of 128
      3. rows (= nc*r) is an exact multiple of the sublane unit
      4. rows >= sublane unit
      5. larger cols (wider contiguous rows)
    """
    best_r, best_score = 1, None
    for r in _divisors(hw):
        rows = nc * r
        cols = hw // r
        score = (
            cols * itemsize * sub_unit <= target_bytes,
            cols >= 128 and cols % 128 == 0,
            rows % sub_unit == 0,
            rows >= sub_unit,
            cols,
        )
        if best_score is None or score > best_score:
            best_score, best_r = score, r
    return best_r


def _pick_row_tile(rows, cols, itemsize, sub_unit, target_bytes, even_grid=False):
    """Full-width blocks: tile only the row axis, in sublane-unit multiples."""
    row_bytes = cols * itemsize
    budget_rows = max(sub_unit, (target_bytes // max(row_bytes, 1)) // sub_unit * sub_unit)
    tr = rows if rows <= budget_rows else budget_rows

    if even_grid:  # v7x: both TensorCores should get equal block counts.
        steps = -(-rows // tr)
        if steps > 1 and steps % 2 == 1:
            cand = -(-rows // (steps + 1))              # ceil(rows / (steps+1))
            cand = -(-cand // sub_unit) * sub_unit      # round up to sublane unit
            cand = max(sub_unit, min(cand, tr))
            if (-(-rows // cand)) % 2 == 0:
                tr = cand
    return tr


def normalization_forward(img, mean, std):
    """JAX/Pallas equivalent of Normalization.forward.

    Args:
      img:  (N, C, H, W) float array.
      mean: (C,) or (C, 1, 1) per-channel mean.
      std:  (C,) or (C, 1, 1) per-channel std.
    Returns:
      (N, C, H, W) normalized image, same dtype as img.
    """
    n, c, h, w = img.shape
    out_dtype = img.dtype
    itemsize = jnp.dtype(img.dtype).itemsize
    sub_unit = max(8, 32 // itemsize)        # 8 (f32), 16 (bf16), 32 (int8/fp8)

    gen = _tpu_generation()
    target_bytes = (4 << 20) if gen in (6, 7) else (2 << 20)

    # Compute dtype: bf16-native FMA on bf16-capable VPUs, f32 otherwise.
    if img.dtype == jnp.bfloat16 and gen in (6, 7):
        compute_dtype = jnp.bfloat16
    else:
        compute_dtype = jnp.float32

    # Fold the divide into a fused multiply-add on C elements (wrapper-side,
    # negligible).  std == 0 yields inf scale, matching PyTorch semantics.
    mean_f = jnp.reshape(mean, (c,)).astype(jnp.float32)
    std_f = jnp.reshape(std, (c,)).astype(jnp.float32)
    scale_c = (1.0 / std_f).astype(compute_dtype)
    bias_c = (-mean_f / std_f).astype(compute_dtype)

    hw = h * w
    r = _choose_layout(n * c, hw, itemsize, sub_unit, target_bytes)
    rows = n * c * r
    cols = hw // r

    # Free view: each original channel-row splits into r contiguous sub-rows,
    # all of the same channel, so per-row scale/bias reproduce the per-channel
    # broadcast exactly.
    img2d = img.reshape(rows, cols)
    scale_col = jnp.repeat(jnp.tile(scale_c, n), r).reshape(rows, 1)
    bias_col = jnp.repeat(jnp.tile(bias_c, n), r).reshape(rows, 1)

    tr = _pick_row_tile(rows, cols, itemsize, sub_unit, target_bytes,
                        even_grid=(gen == 7))
    grid = (pl.cdiv(rows, tr),)

    compiler_kwargs = dict(dimension_semantics=("parallel",))
    if gen in (6, 7):
        # Explicit scoped-VMEM budget; 4 MiB/buffer double-buffered in+out
        # (~16 MiB) fits comfortably.
        compiler_kwargs["vmem_limit_bytes"] = 32 << 20

    out2d = pl.pallas_call(
        _normalize_kernel,
        out_shape=jax.ShapeDtypeStruct((rows, cols), out_dtype),
        grid_spec=pltpu.PrefetchScalarGridSpec(
            num_scalar_prefetch=0,
            grid=grid,
            in_specs=[
                pl.BlockSpec((tr, cols), lambda i: (i, 0)),
                pl.BlockSpec((tr, 1), lambda i: (i, 0)),
                pl.BlockSpec((tr, 1), lambda i: (i, 0)),
            ],
            out_specs=pl.BlockSpec((tr, cols), lambda i: (i, 0)),
        ),
        compiler_params=pltpu.CompilerParams(**compiler_kwargs),
    )(img2d, scale_col, bias_col)

    return out2d.reshape(n, c, h, w)


if __name__ == "__main__":
    # Classic VGG/ImageNet normalization constants, shaped (C, 1, 1) per __init__.
    N, C, H, W = 2, 3, 16, 16
    mean = jnp.array([0.485, 0.456, 0.406], dtype=jnp.float32).reshape(C, 1, 1)
    std = jnp.array([0.229, 0.224, 0.225], dtype=jnp.float32).reshape(C, 1, 1)

    key = jax.random.PRNGKey(0)
    img = jax.random.uniform(key, (N, C, H, W), dtype=jnp.float32)

    out = jax.block_until_ready(normalization_forward(img, mean, std))

    # Correctness check against the plain-JAX reference of the same math.
    ref = (img - mean.reshape(1, C, 1, 1)) / std.reshape(1, C, 1, 1)
    assert out.shape == (N, C, H, W)
    assert jnp.allclose(out, ref, rtol=1e-5, atol=1e-5)

    print("KERNEL_OK")
</pallas_src>

<mosaic_0001>
module attributes {stable_mosaic.version = 11 : i64} {
  func.func @_normalize_kernel(%arg0: i32, %arg1: memref<12x128xf32, #tpu.memory_space<vmem>>, %arg2: memref<12x1xf32, #tpu.memory_space<vmem>>, %arg3: memref<12x1xf32, #tpu.memory_space<vmem>>, %arg4: memref<12x128xf32, #tpu.memory_space<vmem>>) attributes {dimension_semantics = [#tpu.dimension_semantics<parallel>], iteration_bounds = array<i64: 1>, scalar_prefetch = 0 : i64, scratch_operands = 0 : i64, tpu.core_type = #tpu.core_type<tc>, window_params = [{transform_indices = @transform_0, window_bounds = array<i64: 12, 128>}, {transform_indices = @transform_1, window_bounds = array<i64: 12, 1>}, {transform_indices = @transform_2, window_bounds = array<i64: 12, 1>}, {transform_indices = @transform_3, window_bounds = array<i64: 12, 128>}]} {
    %c0 = arith.constant 0 : index
    %c0_0 = arith.constant 0 : index
    %0 = vector.load %arg2[%c0, %c0_0] : memref<12x1xf32, #tpu.memory_space<vmem>>, vector<12x1xf32>
    %c0_1 = arith.constant 0 : index
    %c0_2 = arith.constant 0 : index
    %1 = vector.load %arg3[%c0_1, %c0_2] : memref<12x1xf32, #tpu.memory_space<vmem>>, vector<12x1xf32>
    %c0_3 = arith.constant 0 : index
    %c0_4 = arith.constant 0 : index
    %2 = vector.load %arg1[%c0_3, %c0_4] : memref<12x128xf32, #tpu.memory_space<vmem>>, vector<12x128xf32>
    %3 = vector.broadcast %0 : vector<12x1xf32> to vector<12x128xf32>
    %4 = arith.mulf %2, %3 : vector<12x128xf32>
    %5 = vector.broadcast %1 : vector<12x1xf32> to vector<12x128xf32>
    %6 = arith.addf %4, %5 : vector<12x128xf32>
    %c0_5 = arith.constant 0 : index
    %c0_6 = arith.constant 0 : index
    %7 = vector.load %arg4[%c0_5, %c0_6] : memref<12x128xf32, #tpu.memory_space<vmem>>, vector<12x128xf32>
    tpu.vector_store %arg4[%c0_5, %c0_6], %6 {strides = array<i32>} : memref<12x128xf32, #tpu.memory_space<vmem>>, vector<12x128xf32>,
    return
  }
  func.func @transform_0(%arg0: i32) -> (i32, i32) {
    %c0_i32 = arith.constant 0 : i32
    %c0_i32_0 = arith.constant 0 : i32
    return %arg0, %c0_i32 : i32, i32
  }
  func.func @transform_1(%arg0: i32) -> (i32, i32) {
    %c0_i32 = arith.constant 0 : i32
    %c0_i32_0 = arith.constant 0 : i32
    return %arg0, %c0_i32 : i32, i32
  }
  func.func @transform_2(%arg0: i32) -> (i32, i32) {
    %c0_i32 = arith.constant 0 : i32
    %c0_i32_0 = arith.constant 0 : i32
    return %arg0, %c0_i32 : i32, i32
  }
  func.func @transform_3(%arg0: i32) -> (i32, i32) {
    %c0_i32 = arith.constant 0 : i32
    %c0_i32_0 = arith.constant 0 : i32
    return %arg0, %c0_i32 : i32, i32
  }
}

</mosaic_0001>

<llo_original>
// kernel: tpu_custom_call.1
$region0: #{tpu_custom_call.1}
  #allocation0 [shape = 'u32[]', space=smem, size = 0x4, offset = 0x4, fixed_abs, tag = 'smem constant byte address 0x4 - core index']
  #allocation1 [shape = 'u32[144,128]{1,0:T(1,128)}', space=vmem, size = 0x12000, scoped, tag = 'internal scratch']
  %s0 = inlined_call_operand.vmem [shape: f32[12,128], index: 0, kind: input, shape index: {}]
  %s1 = inlined_call_operand.vmem [shape: f32[12,1], index: 1, kind: input, shape index: {}]
  %s2 = inlined_call_operand.vmem [shape: f32[12,1], index: 2, kind: input, shape index: {}]
  %s3 = inlined_call_operand.hbm [shape: f32[12,128], index: 3, kind: output, shape index: {}]
  %s4 = sld [smem:[#allocation0]]
  $region22: #{tpu_custom_call.1} parent=0
    _
  %s6 = ssub.s32 1, %s4
  %s7 = scalar_select 0, %s6, %s4
  $region1: #{tpu_custom_call.1} parent=0
    #allocation2 [shape = 'u8[8192]{0}', space=vmem, size = 0x2000, scoped, tag = 'output window, operand 0, single buffered']
    #allocation3 [shape = 's32[1]{0}', space=sflag, size = 0x4, scoped, tag = 'scoped memory for tpu_custom_call.1']
    %8 = vsyncpa [#allocation3], 0
    // Predicated region
    $region2: #{tpu_custom_call.1} parent=1 // pred_check
      _
    $region3: #{tpu_custom_call.1} parent=1 // pred_check_branch
      %10 = sbr.rel (0) target = $region5
    $region4: #{tpu_custom_call.1} parent=1 // pred_region
      _
    $region5: #{tpu_custom_call.1} parent=1 // pred_fallthru
      _
    // Predicated region
    $region6: #{tpu_custom_call.1} parent=1 // pred_check
      _
    $region7: #{tpu_custom_call.1} parent=1 // pred_check_branch
      %12 = sbr.rel (0) target = $region9
    $region8: #{tpu_custom_call.1} parent=1 // pred_region
      _
    $region9: #{tpu_custom_call.1} parent=1 // pred_fallthru
      _
    // Predicated region
    $region10: #{tpu_custom_call.1} parent=1 // pred_check
      _
    $region11: #{tpu_custom_call.1} parent=1 // pred_check_branch
      %14 = sbr.rel (0) target = $region13
    $region12: #{tpu_custom_call.1} parent=1 // pred_region
      _
    $region13: #{tpu_custom_call.1} parent=1 // pred_fallthru
      _
    %v15 = vld [vmem:[%s1] sm:$0xff]
    %v16 = vld [vmem:[%s1 + $0x8] sm:$0xf]
    %v17 = vld [vmem:[%s2] sm:$0xff]
    %v18 = vld [vmem:[%s2 + $0x8] sm:$0xf]
    %v19 = vld [vmem:[%s0] sm:$0xff]
    %v20 = vld [vmem:[%s0 + $0x8] sm:$0xf]
    %22 = vset.pattern.permute.xlu0 0
    %23 = vperm.xlu0 %22, %v15
    %v24 = vpop.permute.xlu0 %23
    %27 = vset.pattern.permute.xlu0 0
    %28 = vperm.xlu0 %27, %v16
    %v29 = vpop.permute.xlu0 %28
    %v31 = vmul.f32 %v19, %v24
    %v32 = vmul.f32 %v20, %v29
    %34 = vset.pattern.permute.xlu0 0
    %35 = vperm.xlu0 %34, %v17
    %v36 = vpop.permute.xlu0 %35
    %39 = vset.pattern.permute.xlu0 0
    %40 = vperm.xlu0 %39, %v18
    %v41 = vpop.permute.xlu0 %40
    %v43 = vadd.f32 %v31, %v36
    %v44 = vadd.f32 %v32, %v41
    %45 = vst [vmem:[#allocation2] sm:$0xff] %v43
    %46 = vst [vmem:[#allocation2 + $0x8] sm:$0xf] %v44
    // Predicated region
    $region14: #{tpu_custom_call.1} parent=1 // pred_check
      _
    $region15: #{tpu_custom_call.1} parent=1 // pred_check_branch
      %48 = sbr.rel (0) target = $region17
    $region16: #{tpu_custom_call.1} parent=1 // pred_region
      %s50 = ssub.s32 256, 256
      %51 = vsyncadd [#allocation3], %s50
      %s52 = sshll.u32 [#allocation2], 4
      %s53 = int_to_ptr.vmem [resolvable:$true] %s52
      %58 = dma.vmem_to_hbm [thread:$0]  %s53, 256, %s3, [#allocation3], 128, 128, 8
    $region17: #{tpu_custom_call.1} parent=1 // pred_fallthru
      _
    // Predicated region
    $region18: #{tpu_custom_call.1} parent=1 // pred_check
      _
    $region19: #{tpu_custom_call.1} parent=1 // pred_check_branch
      %60 = sbr.rel (0) target = $region21
    $region20: #{tpu_custom_call.1} parent=1 // pred_region
      %61 = dma.done [#allocation3], 256
    $region21: #{tpu_custom_call.1} parent=1 // pred_fallthru
      _
    %62 = vsyncpa [#allocation3], 1

</llo_original>
